<compile_context>
chip_gen: v7x
topology: tpu7x:2x2x1
jax: 0.10.0
libtpu: 0.0.40
codegen_flags: <defaults>
</compile_context>

<pallas_src>
import functools

import jax
import jax.numpy as jnp
from jax.experimental import pallas as pl
from jax.experimental.pallas import tpu as pltpu

_LANE = 128


def _vmem_budgets():
    """Returns (vmem_limit_bytes, pipeline_budget_bytes) tuned per chip."""
    try:
        phys = int(pltpu.get_tpu_info().vmem_capacity_bytes)
    except Exception:
        phys = 0
    if phys >= 100 * 1024 * 1024:          # v5e / v6e: 128 MiB physical VMEM
        return 64 * 1024 * 1024, 32 * 1024 * 1024
    # v7x (64 MiB physical VMEM) or unknown: conservative ceiling with headroom.
    return 48 * 1024 * 1024, 24 * 1024 * 1024


def _sublane_multiple(dtype) -> int:
    # f32 -> 8, bf16/f16 -> 16, int8/fp8 -> 32.
    return max(8, 32 // jnp.dtype(dtype).itemsize)


# ---------------------------------------------------------------------------
# Kernels
# ---------------------------------------------------------------------------

def _pad_rows_kernel(x_ref, o_ref, *, row_in: int):
    # x_ref: (nb, c_in*hw); o_ref: (nb, c_out*hw).  Lane-dense full rows:
    # copy the real channels, zero-fill the padded tail.
    o_ref[:, :row_in] = x_ref[...]
    o_ref[:, row_in:] = jnp.zeros(
        (o_ref.shape[0], o_ref.shape[1] - row_in), o_ref.dtype)


def _pad_channels_kernel(x_ref, o_ref, *, c_in: int):
    # x_ref: (1, c_in, hwt); o_ref: (1, c_out, hwt).  Full channel extent,
    # HW tiled in multiples of 128 lanes.
    o_ref[:, :c_in, :] = x_ref[...]
    o_ref[:, c_in:, :] = jnp.zeros(
        (1, o_ref.shape[1] - c_in, o_ref.shape[2]), o_ref.dtype)


def _pad_masked_kernel(x_ref, o_ref, *, c_in: int, cb: int,
                       n_cblk: int, n_hwblk: int):
    # Channel-blocked fallback for very large channel counts.  Both the
    # padding channels and any stale tail of a partial input block are
    # zeroed by the iota mask.
    g = pl.program_id(0)
    cblk = (g // n_hwblk) % n_cblk
    ch = cblk * cb + jax.lax.broadcasted_iota(jnp.int32, o_ref.shape, 1)
    xv = x_ref[...]
    o_ref[...] = jnp.where(ch < c_in, xv, jnp.zeros_like(xv))


# ---------------------------------------------------------------------------
# Wrapper
# ---------------------------------------------------------------------------

def channelpad(x: jax.Array, padding: int, *, _debug_budget=None) -> jax.Array:
    """Pallas implementation of ChannelPad.forward for NCHW inputs."""
    n, c_in, h, w = x.shape
    if padding == 0:
        return x
    if padding < 0:
        # Negative padding truncates channels (F.pad semantics); pure slice.
        return x[:, :c_in + padding]
    c_out = c_in + padding
    if c_in == 0:
        return jnp.zeros((n, c_out, h, w), dtype=x.dtype)

    hw = h * w
    dsize = jnp.dtype(x.dtype).itemsize
    sub = _sublane_multiple(x.dtype)
    vmem_limit, budget = _vmem_budgets()
    if _debug_budget is not None:
        budget = _debug_budget

    in_bytes = n * c_in * hw * dsize
    out_bytes = n * c_out * hw * dsize
    cost = pl.CostEstimate(flops=0, transcendentals=0,
                           bytes_accessed=in_bytes + out_bytes)
    cparams = pltpu.CompilerParams(dimension_semantics=("parallel",),
                                   vmem_limit_bytes=vmem_limit)

    row_in, row_out = c_in * hw, c_out * hw
    per_image = 2 * (row_in + row_out) * dsize      # double-buffered in+out

    # ---- Path A: flattened (N, C*HW) rows, batch-blocked. ----------------
    if per_image <= budget:
        max_nb = budget // per_image
        if max_nb >= n:
            nb = n
        elif max_nb >= sub:
            nb = (max_nb // sub) * sub              # sublane-legal batch block
        else:
            nb = 0                                   # fall through to path B
        if nb:
            # Give the v7x megacore split >= 2 steps when steps stay large.
            if nb == n and n >= 2 * sub and (row_in + row_out) * dsize >= (1 << 20):
                nb = max(sub, ((n // 2) // sub) * sub)
            x2 = x.reshape(n, row_in)
            out2 = pl.pallas_call(
                functools.partial(_pad_rows_kernel, row_in=row_in),
                out_shape=jax.ShapeDtypeStruct((n, row_out), x.dtype),
                grid_spec=pltpu.PrefetchScalarGridSpec(
                    num_scalar_prefetch=0,
                    grid=(pl.cdiv(n, nb),),
                    in_specs=[pl.BlockSpec((nb, row_in), lambda g: (g, 0))],
                    out_specs=pl.BlockSpec((nb, row_out), lambda g: (g, 0)),
                ),
                compiler_params=cparams,
                cost_estimate=cost,
            )(x2)
            return out2.reshape(n, c_out, h, w)

    # ---- Path B: (N, C, HW), full channel extent, HW tiled. --------------
    col_bytes = 2 * (c_in + c_out) * dsize          # per HW column, dbl-buffered
    if col_bytes * min(hw, _LANE) <= budget:
        max_hwt = budget // col_bytes
        hwt = hw if hw <= max_hwt else (max_hwt // _LANE) * _LANE
        n_hwblk = pl.cdiv(hw, hwt)
        x3 = x.reshape(n, c_in, hw)
        out3 = pl.pallas_call(
            functools.partial(_pad_channels_kernel, c_in=c_in),
            out_shape=jax.ShapeDtypeStruct((n, c_out, hw), x.dtype),
            grid_spec=pltpu.PrefetchScalarGridSpec(
                num_scalar_prefetch=0,
                grid=(n * n_hwblk,),
                in_specs=[pl.BlockSpec(
                    (1, c_in, hwt), lambda g: (g // n_hwblk, 0, g % n_hwblk))],
                out_specs=pl.BlockSpec(
                    (1, c_out, hwt), lambda g: (g // n_hwblk, 0, g % n_hwblk)),
            ),
            compiler_params=cparams,
            cost_estimate=cost,
        )(x3)
        return out3.reshape(n, c_out, h, w)

    # ---- Path C: huge channel counts; block the channel axis. ------------
    if c_in < sub:
        # TODO(synk): pathological tiny-c_in / enormous-padding combo; use XLA pad.
        return jnp.pad(x, ((0, 0), (0, padding), (0, 0), (0, 0)))
    hwt = hw if hw <= 4 * _LANE else 4 * _LANE
    cb_max = budget // (4 * hwt * dsize)            # in+out, double-buffered
    cb = max(sub, min((c_in // sub) * sub, (cb_max // sub) * sub))
    n_cblk = pl.cdiv(c_out, cb)
    n_cin_blk = pl.cdiv(c_in, cb)
    n_hwblk = pl.cdiv(hw, hwt)
    x3 = x.reshape(n, c_in, hw)

    def _in_map(g):
        b = g // (n_cblk * n_hwblk)
        c = (g // n_hwblk) % n_cblk
        j = g % n_hwblk
        return b, jnp.minimum(c, n_cin_blk - 1), j

    def _out_map(g):
        b = g // (n_cblk * n_hwblk)
        c = (g // n_hwblk) % n_cblk
        j = g % n_hwblk
        return b, c, j

    out3 = pl.pallas_call(
        functools.partial(_pad_masked_kernel, c_in=c_in, cb=cb,
                          n_cblk=n_cblk, n_hwblk=n_hwblk),
        out_shape=jax.ShapeDtypeStruct((n, c_out, hw), x.dtype),
        grid_spec=pltpu.PrefetchScalarGridSpec(
            num_scalar_prefetch=0,
            grid=(n * n_cblk * n_hwblk,),
            in_specs=[pl.BlockSpec((1, cb, hwt), _in_map)],
            out_specs=pl.BlockSpec((1, cb, hwt), _out_map),
        ),
        compiler_params=cparams,
        cost_estimate=cost,
    )(x3)
    return out3.reshape(n, c_out, h, w)


class ChannelPad:
    """Minimal JAX mirror of the PyTorch nn.Module (no parameters)."""

    def __init__(self, padding: int) -> None:
        self.padding = padding

    def __call__(self, x: jax.Array) -> jax.Array:
        return channelpad(x, self.padding)

    def extra_repr(self) -> str:
        return str(self.padding)


if __name__ == "__main__":
    key = jax.random.PRNGKey(0)

    # NCHW input, small shapes: batch=2, channels=4, spatial=16x16.
    x = jax.random.normal(key, (2, 4, 16, 16), dtype=jnp.float32)
    module = ChannelPad(padding=3)
    out = jax.block_until_ready(module(x))
    ref = jnp.pad(x, ((0, 0), (0, 3), (0, 0), (0, 0)))
    assert out.shape == (2, 7, 16, 16), out.shape
    assert out.dtype == x.dtype
    assert jnp.array_equal(out, ref), "mismatch vs reference (path A)"

    # Non-128-multiple spatial extent (late-ResNet-style 7x7): lane-dense rows.
    x7 = jax.random.normal(jax.random.PRNGKey(0), (2, 4, 7, 7), jnp.float32)
    out7 = jax.block_until_ready(channelpad(x7, 3))
    assert jnp.array_equal(out7, jnp.pad(x7, ((0, 0), (0, 3), (0, 0), (0, 0)))), \
        "mismatch vs reference (path A, 7x7)"

    # Exercise the HW-blocked path (B) and the channel-blocked fallback (C)
    # on small shapes by forcing a tiny pipeline budget.
    outb = jax.block_until_ready(channelpad(x, 3, _debug_budget=16 * 1024))
    assert jnp.array_equal(outb, ref), "mismatch vs reference (path B)"

    xc = jax.random.normal(jax.random.PRNGKey(0), (2, 16, 8, 8), jnp.float32)
    outc = jax.block_until_ready(channelpad(xc, 8, _debug_budget=8 * 1024))
    assert jnp.array_equal(outc, jnp.pad(xc, ((0, 0), (0, 8), (0, 0), (0, 0)))), \
        "mismatch vs reference (path C)"

    print("KERNEL_OK")
</pallas_src>

<mosaic_0001>
module attributes {stable_mosaic.version = 11 : i64} {
  func.func @_pad_rows_kernel(%arg0: i32, %arg1: memref<2x1024xf32, #tpu.memory_space<vmem>>, %arg2: memref<2x1792xf32, #tpu.memory_space<vmem>>) attributes {dimension_semantics = [#tpu.dimension_semantics<parallel>], iteration_bounds = array<i64: 1>, scalar_prefetch = 0 : i64, scratch_operands = 0 : i64, tpu.core_type = #tpu.core_type<tc>, window_params = [{transform_indices = @transform_0, window_bounds = array<i64: 2, 1024>}, {transform_indices = @transform_1, window_bounds = array<i64: 2, 1792>}]} {
    %c0 = arith.constant 0 : index
    %c0_0 = arith.constant 0 : index
    %0 = vector.load %arg1[%c0, %c0_0] : memref<2x1024xf32, #tpu.memory_space<vmem>>, vector<2x1024xf32>
    %c0_1 = arith.constant 0 : index
    %c0_2 = arith.constant 0 : index
    %1 = vector.load %arg2[%c0_1, %c0_2] : memref<2x1792xf32, #tpu.memory_space<vmem>>, vector<2x1024xf32>
    tpu.vector_store %arg2[%c0_1, %c0_2], %0 {strides = array<i32>} : memref<2x1792xf32, #tpu.memory_space<vmem>>, vector<2x1024xf32>,
    %cst = arith.constant 0.000000e+00 : f32
    %2 = vector.broadcast %cst : f32 to vector<2x768xf32>
    %c0_3 = arith.constant 0 : index
    %c1024 = arith.constant 1024 : index
    %3 = vector.load %arg2[%c0_3, %c1024] : memref<2x1792xf32, #tpu.memory_space<vmem>>, vector<2x768xf32>
    tpu.vector_store %arg2[%c0_3, %c1024], %2 {strides = array<i32>} : memref<2x1792xf32, #tpu.memory_space<vmem>>, vector<2x768xf32>,
    return
  }
  func.func @transform_0(%arg0: i32) -> (i32, i32) {
    %c0_i32 = arith.constant 0 : i32
    %c0_i32_0 = arith.constant 0 : i32
    return %arg0, %c0_i32 : i32, i32
  }
  func.func @transform_1(%arg0: i32) -> (i32, i32) {
    %c0_i32 = arith.constant 0 : i32
    %c0_i32_0 = arith.constant 0 : i32
    return %arg0, %c0_i32 : i32, i32
  }
}

</mosaic_0001>

<llo_original>
// kernel: tpu_custom_call.1
$region0: #{tpu_custom_call.1}
  #allocation0 [shape = 'u32[]', space=smem, size = 0x4, offset = 0x4, fixed_abs, tag = 'smem constant byte address 0x4 - core index']
  #allocation1 [shape = 'u32[144,128]{1,0:T(1,128)}', space=vmem, size = 0x12000, scoped, tag = 'internal scratch']
  %s0 = inlined_call_operand.hbm [shape: f32[2,1024], index: 0, kind: input, shape index: {}]
  %s1 = inlined_call_operand.hbm [shape: f32[2,1792], index: 1, kind: output, shape index: {}]
  %s2 = sld [smem:[#allocation0]]
  $region18: #{tpu_custom_call.1} parent=0
    _
  %s4 = ssub.s32 1, %s2
  %s5 = scalar_select 0, %s4, %s2
  $region1: #{tpu_custom_call.1} parent=0
    #allocation2 [shape = 'u8[8192]{0}', space=vmem, size = 0x2000, scoped, tag = 'input window, operand 0, single buffered']
    #allocation3 [shape = 's32[1]{0}', space=sflag, size = 0x4, scoped, tag = 'scoped memory for tpu_custom_call.1']
    #allocation4 [shape = 's32[1]{0}', space=sflag, size = 0x4, scoped, tag = 'scoped memory for tpu_custom_call.1']
    #allocation5 [shape = 'u8[14336]{0}', space=vmem, size = 0x3800, scoped, tag = 'output window, operand 0, single buffered']
    %6 = vsyncpa [#allocation3], 0
    %7 = vsyncpa [#allocation4], 0
    // Predicated region
    $region2: #{tpu_custom_call.1} parent=1 // pred_check
      _
    $region3: #{tpu_custom_call.1} parent=1 // pred_check_branch
      %9 = sbr.rel (0) target = $region5
    $region4: #{tpu_custom_call.1} parent=1 // pred_region
      %s11 = ssub.s32 256, 256
      %12 = vsyncadd [#allocation3], %s11
      %s14 = sshll.u32 [#allocation2], 4
      %s15 = int_to_ptr.vmem [resolvable:$true] %s14
      %17 = dma.hbm_to_vmem [thread:$0]  %s0, 256, %s15, [#allocation3]
    $region5: #{tpu_custom_call.1} parent=1 // pred_fallthru
      _
    // Predicated region
    $region6: #{tpu_custom_call.1} parent=1 // pred_check
      _
    $region7: #{tpu_custom_call.1} parent=1 // pred_check_branch
      %19 = sbr.rel (0) target = $region9
    $region8: #{tpu_custom_call.1} parent=1 // pred_region
      %20 = dma.done [#allocation3], 256
    $region9: #{tpu_custom_call.1} parent=1 // pred_fallthru
      _
    %v21 = vld [vmem:[#allocation2] sm:$0xff]
    %v22 = vld [vmem:[#allocation2 + $0x8] sm:$0xff]
    %23 = vst [vmem:[#allocation5] sm:$0xff] %v21
    %24 = vst [vmem:[#allocation5 + $0x8] sm:$0xff] %v22
    %25 = vst [vmem:[#allocation5 + $0x10] sm:$0xff] 0.0
    %26 = vst [vmem:[#allocation5 + $0x18] sm:$0xf] 0.0
    // Predicated region
    $region10: #{tpu_custom_call.1} parent=1 // pred_check
      _
    $region11: #{tpu_custom_call.1} parent=1 // pred_check_branch
      %28 = sbr.rel (0) target = $region13
    $region12: #{tpu_custom_call.1} parent=1 // pred_region
      %s30 = ssub.s32 448, 448
      %31 = vsyncadd [#allocation4], %s30
      %s33 = sshll.u32 [#allocation5], 4
      %s34 = int_to_ptr.vmem [resolvable:$true] %s33
      %36 = dma.vmem_to_hbm [thread:$0]  %s34, 448, %s1, [#allocation4]
    $region13: #{tpu_custom_call.1} parent=1 // pred_fallthru
      _
    // Predicated region
    $region14: #{tpu_custom_call.1} parent=1 // pred_check
      _
    $region15: #{tpu_custom_call.1} parent=1 // pred_check_branch
      %38 = sbr.rel (0) target = $region17
    $region16: #{tpu_custom_call.1} parent=1 // pred_region
      %39 = dma.done [#allocation4], 448
    $region17: #{tpu_custom_call.1} parent=1 // pred_fallthru
      _
    %40 = vsyncpa [#allocation3], 1
    %41 = vsyncpa [#allocation4], 1

</llo_original>
